<compile_context>
chip_gen: v7x
topology: tpu7x:2x2x1
jax: 0.10.0
libtpu: 0.0.40
codegen_flags: <defaults>
</compile_context>

<pallas_src>
import jax
import jax.numpy as jnp
from jax import lax
from jax.experimental import pallas as pl
from jax.experimental.pallas import tpu as pltpu


# ---------------------------------------------------------------------------
# Generation-aware hardware introspection.
# ---------------------------------------------------------------------------
def _tpu_info():
    """Returns (vmem_capacity_bytes, tensorcores_per_chip)."""
    vmem_cap = 64 << 20  # conservative default (v7x has the smallest VMEM)
    try:
        info = pltpu.get_tpu_info()
        vmem_cap = int(getattr(info, "vmem_capacity_bytes", vmem_cap))
    except Exception:
        pass
    num_tc = 1
    try:
        kind = jax.devices()[0].device_kind.lower()
        # v7x has 2 TensorCores per chip; v5e/v6e have 1.
        if "7" in kind:
            num_tc = 2
    except Exception:
        pass
    return vmem_cap, num_tc


def _pick_batch_tile(b, per_item_bytes, num_tc, target_bytes=8 << 20):
    """Largest divisor of b whose block fits `target_bytes`.

    On 2-TC chips (v7x) require >= 4 grid steps (>=2 per core) so the 2-deep
    BlockSpec pipeline has something to prefetch/overlap; on 1-TC chips take
    the largest block that fits (more/smaller steps are strictly worse for an
    HBM-bound kernel)."""
    min_steps = 4 if num_tc >= 2 else 1
    min_steps = min(min_steps, b)
    best = 1
    for cand in range(1, b + 1):
        if b % cand:
            continue
        if cand * per_item_bytes <= target_bytes and (b // cand) >= min_steps:
            best = cand
    return best


def _pick_hw_tile(hw_pad, c, itemsize, target_bytes=8 << 20):
    """Largest multiple-of-128 divisor of hw_pad with c*thw*itemsize <= target."""
    n128 = hw_pad // 128
    best = 128
    for d in range(1, n128 + 1):
        if n128 % d:
            continue
        thw = 128 * d
        if c * thw * itemsize <= target_bytes:
            best = thw
    return best


# ---------------------------------------------------------------------------
# Fused single-pass kernel: pool + MLP + scale in one grid step per batch tile.
# ---------------------------------------------------------------------------
def _make_fused_kernel(hw_true, hw_block):
    masked = hw_block != hw_true
    inv_hw = 1.0 / float(hw_true)

    def kernel(x_ref, w1_ref, w2_ref, o_ref):
        x = x_ref[...]                                     # (bt, C, HWp) native dtype
        if masked:
            lane = lax.broadcasted_iota(jnp.int32, (1, 1, hw_block), 2)
            xm = jnp.where(lane < hw_true, x, jnp.array(-jnp.inf, x.dtype))
            max_pool = jnp.max(xm, axis=2).astype(jnp.float32)       # (bt, C)
        else:
            max_pool = jnp.max(x, axis=2).astype(jnp.float32)        # (bt, C)
        # Padded columns are exactly zero, so they do not perturb the sum;
        # accumulate the sum in f32 regardless of the input dtype.
        avg_pool = jnp.sum(x.astype(jnp.float32), axis=2) * inv_hw   # (bt, C)

        w1 = w1_ref[...]                                   # (C, hidden)
        w2 = w2_ref[...]                                   # (hidden, C)

        def fc(p):                                         # Linear->ReLU->Linear->Sigmoid
            h = jnp.maximum(jnp.dot(p, w1, preferred_element_type=jnp.float32), 0.0)
            return jax.nn.sigmoid(jnp.dot(h, w2, preferred_element_type=jnp.float32))

        att = jax.nn.sigmoid(fc(max_pool) + fc(avg_pool))  # (bt, C)  second sigmoid

        # Re-read x and scale in the native dtype (no f32 tile copy kept live);
        # broadcast the per-channel scale across the lane (HW) axis.
        o_ref[...] = x_ref[...] * att[:, :, None].astype(o_ref.dtype)

    return kernel


def _fused_call(x3, w1_t, w2_t, hw_true, bt, vmem_cap):
    b, c, hw_pad = x3.shape
    hidden = w1_t.shape[1]
    itemsize = jnp.dtype(x3.dtype).itemsize
    block_bytes = bt * c * hw_pad * itemsize
    weight_bytes = (w1_t.size + w2_t.size) * jnp.dtype(w1_t.dtype).itemsize
    # in + out blocks (double-buffered) + one temp + resident weights + margin,
    # clamped to this generation's physical VMEM.
    vmem_limit = int(min(vmem_cap,
                         max(5 * block_bytes + 2 * weight_bytes + (4 << 20), 32 << 20)))
    cost = pl.CostEstimate(
        flops=int(2 * b * c * hw_pad + 8 * b * c * hidden),
        transcendentals=int(3 * b * c),
        bytes_accessed=int(2 * b * c * hw_pad * itemsize + 2 * weight_bytes),
    )
    return pl.pallas_call(
        _make_fused_kernel(hw_true, hw_pad),
        out_shape=jax.ShapeDtypeStruct((b, c, hw_pad), x3.dtype),
        grid_spec=pltpu.PrefetchScalarGridSpec(
            num_scalar_prefetch=0,
            grid=(b // bt,),
            in_specs=[
                pl.BlockSpec((bt, c, hw_pad), lambda i: (i, 0, 0)),
                pl.BlockSpec((c, hidden), lambda i: (0, 0)),
                pl.BlockSpec((hidden, c), lambda i: (0, 0)),
            ],
            out_specs=pl.BlockSpec((bt, c, hw_pad), lambda i: (i, 0, 0)),
        ),
        compiler_params=pltpu.CompilerParams(
            dimension_semantics=("parallel",),
            vmem_limit_bytes=vmem_limit,
        ),
        cost_estimate=cost,
    )(x3, w1_t, w2_t)


# ---------------------------------------------------------------------------
# Two-phase path for per-image slabs too large for single-pass VMEM (v7x 64 MiB):
#   phase A: HW-tiled running max/sum -> att (B, C, 1)
#   phase B: HW-tiled rescan to scale x by att.
# ---------------------------------------------------------------------------
def _make_pool_kernel(hw_true, thw, n_hw):
    masked = (n_hw * thw) != hw_true
    inv_hw = 1.0 / float(hw_true)

    def kernel(x_ref, w1_ref, w2_ref, att_ref, max_sc, sum_sc):
        k = pl.program_id(1)

        @pl.when(k == 0)
        def _():
            max_sc[...] = jnp.full_like(max_sc, -jnp.inf)
            sum_sc[...] = jnp.zeros_like(sum_sc)

        x = x_ref[...]                                     # (bt, C, thw)
        if masked:
            lane = k * thw + lax.broadcasted_iota(jnp.int32, (1, 1, thw), 2)
            xm = jnp.where(lane < hw_true, x, jnp.array(-jnp.inf, x.dtype))
        else:
            xm = x
        max_sc[...] = jnp.maximum(max_sc[...], jnp.max(xm, axis=2).astype(jnp.float32))
        # Zero padding does not perturb the sum; accumulate in f32.
        sum_sc[...] = sum_sc[...] + jnp.sum(x.astype(jnp.float32), axis=2)

        @pl.when(k == n_hw - 1)
        def _():
            w1 = w1_ref[...]
            w2 = w2_ref[...]

            def fc(p):
                h = jnp.maximum(jnp.dot(p, w1, preferred_element_type=jnp.float32), 0.0)
                return jax.nn.sigmoid(jnp.dot(h, w2, preferred_element_type=jnp.float32))

            att = jax.nn.sigmoid(fc(max_sc[...]) + fc(sum_sc[...] * inv_hw))  # (bt, C)
            att_ref[...] = att[:, :, None].astype(att_ref.dtype)

    return kernel


def _scale_kernel(att_ref, x_ref, o_ref):
    # (bt, C, 1) broadcast across the HW lane axis, native-dtype multiply.
    o_ref[...] = x_ref[...] * att_ref[...].astype(o_ref.dtype)


def _two_phase_call(x3, w1_t, w2_t, hw_true, num_tc, vmem_cap, target_bytes):
    b, c, hw_pad = x3.shape
    hidden = w1_t.shape[1]
    itemsize = jnp.dtype(x3.dtype).itemsize
    weight_bytes = (w1_t.size + w2_t.size) * jnp.dtype(w1_t.dtype).itemsize

    thw = _pick_hw_tile(hw_pad, c, itemsize, target_bytes)
    n_hw = hw_pad // thw
    bt = _pick_batch_tile(b, c * thw * itemsize, num_tc, target_bytes)
    block_bytes = bt * c * thw * itemsize
    vmem_limit = int(min(vmem_cap,
                         max(5 * block_bytes + 2 * weight_bytes + (4 << 20), 32 << 20)))

    att = pl.pallas_call(
        _make_pool_kernel(hw_true, thw, n_hw),
        out_shape=jax.ShapeDtypeStruct((b, c, 1), jnp.float32),
        grid_spec=pltpu.PrefetchScalarGridSpec(
            num_scalar_prefetch=0,
            grid=(b // bt, n_hw),
            in_specs=[
                pl.BlockSpec((bt, c, thw), lambda i, k: (i, 0, k)),
                pl.BlockSpec((c, hidden), lambda i, k: (0, 0)),
                pl.BlockSpec((hidden, c), lambda i, k: (0, 0)),
            ],
            out_specs=pl.BlockSpec((bt, c, 1), lambda i, k: (i, 0, 0)),
            scratch_shapes=[
                pltpu.VMEM((bt, c), jnp.float32),   # running max
                pltpu.VMEM((bt, c), jnp.float32),   # running sum
            ],
        ),
        compiler_params=pltpu.CompilerParams(
            dimension_semantics=("parallel", "arbitrary"),
            vmem_limit_bytes=vmem_limit,
        ),
        cost_estimate=pl.CostEstimate(
            flops=int(2 * b * c * hw_pad + 8 * b * c * hidden),
            transcendentals=int(3 * b * c),
            bytes_accessed=int(b * c * hw_pad * itemsize + 2 * weight_bytes),
        ),
    )(x3, w1_t, w2_t)

    out3 = pl.pallas_call(
        _scale_kernel,
        out_shape=jax.ShapeDtypeStruct((b, c, hw_pad), x3.dtype),
        grid_spec=pltpu.PrefetchScalarGridSpec(
            num_scalar_prefetch=0,
            grid=(b // bt, n_hw),
            in_specs=[
                pl.BlockSpec((bt, c, 1), lambda i, k: (i, 0, 0)),
                pl.BlockSpec((bt, c, thw), lambda i, k: (i, 0, k)),
            ],
            out_specs=pl.BlockSpec((bt, c, thw), lambda i, k: (i, 0, k)),
        ),
        compiler_params=pltpu.CompilerParams(
            dimension_semantics=("parallel", "parallel"),
            vmem_limit_bytes=vmem_limit,
        ),
        cost_estimate=pl.CostEstimate(
            flops=int(b * c * hw_pad),
            transcendentals=0,
            bytes_accessed=int(2 * b * c * hw_pad * itemsize + b * c * 4),
        ),
    )(att, x3)
    return out3


# ---------------------------------------------------------------------------
# Public wrapper.
# ---------------------------------------------------------------------------
def channel_attention_pallas(x_nchw, w1, w2, *, force_two_phase=False,
                             block_target_bytes=8 << 20):
    """x_nchw: (B, C, H, W).
    w1: torch-style Linear weight (C//ratio, C); w2: (C, C//ratio)."""
    b, c, h, w = x_nchw.shape
    hw = h * w
    itemsize = jnp.dtype(x_nchw.dtype).itemsize

    vmem_cap, num_tc = _tpu_info()

    # NCHW -> (B, C, HW) is a free reshape.  If HW is not a multiple of 128,
    # zero-pad the lane axis so stores are unmasked lane-dense vst; pooling
    # masks the padding and the mean uses the true HW denominator.
    hw_pad = ((hw + 127) // 128) * 128
    x3 = x_nchw.reshape(b, c, hw)
    if hw_pad != hw:
        x3 = jnp.pad(x3, ((0, 0), (0, 0), (0, hw_pad - hw)))

    w1_t = w1.T   # (C, hidden)
    w2_t = w2.T   # (hidden, C)
    weight_bytes = (w1_t.size + w2_t.size) * jnp.dtype(w1_t.dtype).itemsize

    per_img = c * hw_pad * itemsize
    bt = _pick_batch_tile(b, per_img, num_tc, block_target_bytes)
    fused_need = 5 * bt * per_img + 2 * weight_bytes + (4 << 20)
    fits_fused = fused_need <= int(0.75 * vmem_cap)   # headroom under physical VMEM

    if force_two_phase or not fits_fused:
        out3 = _two_phase_call(x3, w1_t, w2_t, hw, num_tc, vmem_cap,
                               block_target_bytes)
    else:
        out3 = _fused_call(x3, w1_t, w2_t, hw, bt, vmem_cap)

    if hw_pad != hw:
        out3 = out3[:, :, :hw]
    return out3.reshape(b, c, h, w)


def channel_attention_ref(x, w1, w2):
    """Plain-JAX reference matching the PyTorch module (including both sigmoids)."""
    max_pool = jnp.max(x, axis=(2, 3))
    avg_pool = jnp.mean(x, axis=(2, 3))

    def fc(p):
        h1 = jnp.maximum(p @ w1.T, 0.0)
        return jax.nn.sigmoid(h1 @ w2.T)

    out = jax.nn.sigmoid(fc(max_pool) + fc(avg_pool))
    return out[:, :, None, None] * x


if __name__ == "__main__":
    RATIO = 16  # ratio=16 requires C >= 16 for a non-empty hidden layer.

    def run_case(case_id, b, c, h, w, **kwargs):
        hidden = max(c // RATIO, 1)
        key = jax.random.fold_in(jax.random.PRNGKey(0), case_id)
        kx, k1, k2 = jax.random.split(key, 3)
        x = jax.random.normal(kx, (b, c, h, w), dtype=jnp.float32)
        # Deterministic "Linear" weights (no bias), torch weight layout (out, in).
        w1 = jax.random.normal(k1, (hidden, c), dtype=jnp.float32) / jnp.sqrt(c)
        w2 = jax.random.normal(k2, (c, hidden), dtype=jnp.float32) / jnp.sqrt(hidden)

        out = jax.block_until_ready(channel_attention_pallas(x, w1, w2, **kwargs))
        ref = channel_attention_ref(x, w1, w2)
        assert out.shape == x.shape
        assert jnp.allclose(out, ref, rtol=1e-5, atol=1e-5), \
            f"mismatch vs reference in case {case_id}"

    # 1) Fused single-pass path, lane-dense HW (256 is a multiple of 128).
    run_case(0, 2, 32, 16, 16)
    # 2) Fused path with HW padding/masking (196 is NOT a multiple of 128).
    run_case(1, 2, 32, 14, 14)
    # 3) Two-phase (pool then rescan) path with multiple HW tiles, as used when
    #    a per-image slab would not fit the generation's VMEM budget.
    run_case(2, 2, 32, 16, 16, force_two_phase=True, block_target_bytes=16 * 1024)

    print("KERNEL_OK")
</pallas_src>

<mosaic_0001>
module attributes {stable_mosaic.version = 11 : i64} {
  func.func @kernel(%arg0: i32, %arg1: memref<2x32x256xf32, #tpu.memory_space<vmem>>, %arg2: memref<32x2xf32, #tpu.memory_space<vmem>>, %arg3: memref<2x32xf32, #tpu.memory_space<vmem>>, %arg4: memref<2x32x256xf32, #tpu.memory_space<vmem>>) attributes {dimension_semantics = [#tpu.dimension_semantics<parallel>], iteration_bounds = array<i64: 1>, scalar_prefetch = 0 : i64, scratch_operands = 0 : i64, tpu.core_type = #tpu.core_type<tc>, window_params = [{transform_indices = @transform_0, window_bounds = array<i64: 2, 32, 256>}, {pipeline_mode = #tpu.pipeline_mode<synchronous>, transform_indices = @transform_1, window_bounds = array<i64: 32, 2>}, {pipeline_mode = #tpu.pipeline_mode<synchronous>, transform_indices = @transform_2, window_bounds = array<i64: 2, 32>}, {transform_indices = @transform_3, window_bounds = array<i64: 2, 32, 256>}]} {
    %c0 = arith.constant 0 : index
    %c0_0 = arith.constant 0 : index
    %c0_1 = arith.constant 0 : index
    %0 = vector.load %arg1[%c0, %c0_0, %c0_1] : memref<2x32x256xf32, #tpu.memory_space<vmem>>, vector<2x32x256xf32>
    %cst = arith.constant dense<0xFF800000> : vector<2x32xf32>
    %1 = vector.multi_reduction <maximumf>, %0, %cst [2] : vector<2x32x256xf32> to vector<2x32xf32>
    %cst_2 = arith.constant dense<0.000000e+00> : vector<2x32xf32>
    %2 = vector.multi_reduction <add>, %0, %cst_2 [2] : vector<2x32x256xf32> to vector<2x32xf32>
    %cst_3 = arith.constant 3.906250e-03 : f32
    %3 = vector.broadcast %cst_3 : f32 to vector<2x32xf32>
    %4 = arith.mulf %2, %3 : vector<2x32xf32>
    %c0_4 = arith.constant 0 : index
    %c0_5 = arith.constant 0 : index
    %5 = vector.load %arg2[%c0_4, %c0_5] : memref<32x2xf32, #tpu.memory_space<vmem>>, vector<32x2xf32>
    %c0_6 = arith.constant 0 : index
    %c0_7 = arith.constant 0 : index
    %6 = vector.load %arg3[%c0_6, %c0_7] : memref<2x32xf32, #tpu.memory_space<vmem>>, vector<2x32xf32>
    %cst_8 = arith.constant dense<0.000000e+00> : vector<2x2xf32>
    %7 = tpu.matmul %1, %5, %cst_8 {dimension_numbers = #tpu.dot_dimension_numbers<[1], [0], [0], [1], [0, 0, 1, 1], [], []>} : vector<2x32xf32>, vector<32x2xf32>, vector<2x2xf32> -> vector<2x2xf32>
    %cst_9 = arith.constant 0.000000e+00 : f32
    %8 = vector.broadcast %cst_9 : f32 to vector<2x2xf32>
    %9 = arith.maximumf %7, %8 : vector<2x2xf32>
    %cst_10 = arith.constant dense<0.000000e+00> : vector<2x32xf32>
    %10 = tpu.matmul %9, %6, %cst_10 {dimension_numbers = #tpu.dot_dimension_numbers<[1], [0], [0], [1], [0, 0, 1, 1], [], []>} : vector<2x2xf32>, vector<2x32xf32>, vector<2x32xf32> -> vector<2x32xf32>
    %11 = arith.negf %10 : vector<2x32xf32>
    %12 = math.exp %11 : vector<2x32xf32>
    %cst_11 = arith.constant 1.000000e+00 : f32
    %13 = vector.broadcast %cst_11 : f32 to vector<2x32xf32>
    %14 = arith.addf %13, %12 : vector<2x32xf32>
    %15 = arith.divf %13, %14 : vector<2x32xf32>
    %cst_12 = arith.constant dense<0.000000e+00> : vector<2x2xf32>
    %16 = tpu.matmul %4, %5, %cst_12 {dimension_numbers = #tpu.dot_dimension_numbers<[1], [0], [0], [1], [0, 0, 1, 1], [], []>} : vector<2x32xf32>, vector<32x2xf32>, vector<2x2xf32> -> vector<2x2xf32>
    %cst_13 = arith.constant 0.000000e+00 : f32
    %17 = vector.broadcast %cst_13 : f32 to vector<2x2xf32>
    %18 = arith.maximumf %16, %17 : vector<2x2xf32>
    %cst_14 = arith.constant dense<0.000000e+00> : vector<2x32xf32>
    %19 = tpu.matmul %18, %6, %cst_14 {dimension_numbers = #tpu.dot_dimension_numbers<[1], [0], [0], [1], [0, 0, 1, 1], [], []>} : vector<2x2xf32>, vector<2x32xf32>, vector<2x32xf32> -> vector<2x32xf32>
    %20 = arith.negf %19 : vector<2x32xf32>
    %21 = math.exp %20 : vector<2x32xf32>
    %cst_15 = arith.constant 1.000000e+00 : f32
    %22 = vector.broadcast %cst_15 : f32 to vector<2x32xf32>
    %23 = arith.addf %22, %21 : vector<2x32xf32>
    %24 = arith.divf %22, %23 : vector<2x32xf32>
    %25 = arith.addf %15, %24 : vector<2x32xf32>
    %26 = arith.negf %25 : vector<2x32xf32>
    %27 = math.exp %26 : vector<2x32xf32>
    %cst_16 = arith.constant 1.000000e+00 : f32
    %28 = vector.broadcast %cst_16 : f32 to vector<2x32xf32>
    %29 = arith.addf %28, %27 : vector<2x32xf32>
    %30 = arith.divf %28, %29 : vector<2x32xf32>
    %c0_17 = arith.constant 0 : index
    %c0_18 = arith.constant 0 : index
    %c0_19 = arith.constant 0 : index
    %31 = vector.load %arg1[%c0_17, %c0_18, %c0_19] : memref<2x32x256xf32, #tpu.memory_space<vmem>>, vector<2x32x256xf32>
    %32 = vector.shape_cast %30 : vector<2x32xf32> to vector<2x32x1xf32>
    %33 = vector.broadcast %32 : vector<2x32x1xf32> to vector<2x32x256xf32>
    %34 = arith.mulf %31, %33 : vector<2x32x256xf32>
    %c0_20 = arith.constant 0 : index
    %c0_21 = arith.constant 0 : index
    %c0_22 = arith.constant 0 : index
    %35 = vector.load %arg4[%c0_20, %c0_21, %c0_22] : memref<2x32x256xf32, #tpu.memory_space<vmem>>, vector<2x32x256xf32>
    tpu.vector_store %arg4[%c0_20, %c0_21, %c0_22], %34 {strides = array<i32>} : memref<2x32x256xf32, #tpu.memory_space<vmem>>, vector<2x32x256xf32>,
    return
  }
  func.func @transform_0(%arg0: i32) -> (i32, i32, i32) {
    %c0_i32 = arith.constant 0 : i32
    %c0_i32_0 = arith.constant 0 : i32
    %c0_i32_1 = arith.constant 0 : i32
    return %arg0, %c0_i32, %c0_i32_0 : i32, i32, i32
  }
  func.func @transform_1(%arg0: i32) -> (i32, i32) {
    %c0_i32 = arith.constant 0 : i32
    %c0_i32_0 = arith.constant 0 : i32
    %c0_i32_1 = arith.constant 0 : i32
    return %c0_i32, %c0_i32_0 : i32, i32
  }
  func.func @transform_2(%arg0: i32) -> (i32, i32) {
    %c0_i32 = arith.constant 0 : i32
    %c0_i32_0 = arith.constant 0 : i32
    %c0_i32_1 = arith.constant 0 : i32
    return %c0_i32, %c0_i32_0 : i32, i32
  }
  func.func @transform_3(%arg0: i32) -> (i32, i32, i32) {
    %c0_i32 = arith.constant 0 : i32
    %c0_i32_0 = arith.constant 0 : i32
    %c0_i32_1 = arith.constant 0 : i32
    return %arg0, %c0_i32, %c0_i32_0 : i32, i32, i32
  }
}

</mosaic_0001>

<llo_original>
// kernel: tpu_custom_call.1
$region0: #{tpu_custom_call.1}
  #allocation0 [shape = 'u32[]', space=smem, size = 0x4, offset = 0x4, fixed_abs, tag = 'smem constant byte address 0x4 - core index']
  #allocation1 [shape = 'u32[144,128]{1,0:T(1,128)}', space=vmem, size = 0x12000, scoped, tag = 'internal scratch']
  %s0 = inlined_call_operand.hbm [shape: f32[2,32,256], index: 0, kind: input, shape index: {}]
  %s1 = inlined_call_operand.vmem [shape: f32[32,2], index: 1, kind: input, shape index: {}]
  %s2 = inlined_call_operand.vmem [shape: f32[2,32], index: 2, kind: input, shape index: {}]
  %s3 = inlined_call_operand.hbm [shape: f32[2,32,256], index: 3, kind: output, shape index: {}]
  %s4 = sld [smem:[#allocation0]]
  $region26: #{tpu_custom_call.1} parent=0
    _
  %s6 = ssub.s32 1, %s4
  %s7 = scalar_select 0, %s6, %s4
  $region1: #{tpu_custom_call.1} parent=0
    #allocation2 [shape = 'u8[65536]{0}', space=vmem, size = 0x10000, scoped, tag = 'input window, operand 0, single buffered']
    #allocation3 [shape = 's32[1]{0}', space=sflag, size = 0x4, scoped, tag = 'scoped memory for tpu_custom_call.1']
    #allocation4 [shape = 's32[1]{0}', space=sflag, size = 0x4, scoped, tag = 'scoped memory for tpu_custom_call.1']
    #allocation5 [shape = 'u8[65536]{0}', space=vmem, size = 0x10000, scoped, tag = 'output window, operand 0, single buffered']
    %8 = vsyncpa [#allocation3], 0
    %9 = vsyncpa [#allocation4], 0
    // Predicated region
    $region2: #{tpu_custom_call.1} parent=1 // pred_check
      _
    $region3: #{tpu_custom_call.1} parent=1 // pred_check_branch
      %11 = sbr.rel (0) target = $region5
    $region4: #{tpu_custom_call.1} parent=1 // pred_region
      %s13 = ssub.s32 2048, 2048
      %14 = vsyncadd [#allocation3], %s13
      %s15 = sshll.u32 [#allocation2], 4
      %s16 = int_to_ptr.vmem [resolvable:$true] %s15
      %21 = dma.hbm_to_vmem [thread:$0]  %s0, 2048, %s16, [#allocation3], 256, 256, 16
    $region5: #{tpu_custom_call.1} parent=1 // pred_fallthru
      _
    // Predicated region
    $region6: #{tpu_custom_call.1} parent=1 // pred_check
      _
    $region7: #{tpu_custom_call.1} parent=1 // pred_check_branch
      %23 = sbr.rel (0) target = $region9
    $region8: #{tpu_custom_call.1} parent=1 // pred_region
      _
    $region9: #{tpu_custom_call.1} parent=1 // pred_fallthru
      _
    // Predicated region
    $region10: #{tpu_custom_call.1} parent=1 // pred_check
      _
    $region11: #{tpu_custom_call.1} parent=1 // pred_check_branch
      %25 = sbr.rel (0) target = $region13
    $region12: #{tpu_custom_call.1} parent=1 // pred_region
      _
    $region13: #{tpu_custom_call.1} parent=1 // pred_fallthru
      _
    // Predicated region
    $region14: #{tpu_custom_call.1} parent=1 // pred_check
      _
    $region15: #{tpu_custom_call.1} parent=1 // pred_check_branch
      %27 = sbr.rel (0) target = $region17
    $region16: #{tpu_custom_call.1} parent=1 // pred_region
      %28 = dma.done [#allocation3], 2048
    $region17: #{tpu_custom_call.1} parent=1 // pred_fallthru
      _
    %v29 = vld [vmem:[#allocation2] sm:$0xff]
    %v30 = vld [vmem:[#allocation2 + $0x8] sm:$0xff]
    %v31 = vld [vmem:[#allocation2 + $0x10] sm:$0xff]
    %v32 = vld [vmem:[#allocation2 + $0x18] sm:$0xff]
    %v33 = vld [vmem:[#allocation2 + $0x20] sm:$0xff]
    %v34 = vld [vmem:[#allocation2 + $0x28] sm:$0xff]
    %v35 = vld [vmem:[#allocation2 + $0x30] sm:$0xff]
    %v36 = vld [vmem:[#allocation2 + $0x38] sm:$0xff]
    %v37 = vld [vmem:[#allocation2 + $0x40] sm:$0xff]
    %v38 = vld [vmem:[#allocation2 + $0x48] sm:$0xff]
    %v39 = vld [vmem:[#allocation2 + $0x50] sm:$0xff]
    %v40 = vld [vmem:[#allocation2 + $0x58] sm:$0xff]
    %v41 = vld [vmem:[#allocation2 + $0x60] sm:$0xff]
    %v42 = vld [vmem:[#allocation2 + $0x68] sm:$0xff]
    %v43 = vld [vmem:[#allocation2 + $0x70] sm:$0xff]
    %v44 = vld [vmem:[#allocation2 + $0x78] sm:$0xff]
    %v45 = vmax.f32 %v29, %v30
    %46 = vmax.xlane.f32.xlu0 %v45
    %v47 = vpop.xlane.xlu0 %46
    %v48 = vmax.f32 %v31, %v32
    %49 = vmax.xlane.f32.xlu0 %v48
    %v50 = vpop.xlane.xlu0 %49
    %v51 = vmax.f32 %v33, %v34
    %52 = vmax.xlane.f32.xlu0 %v51
    %v53 = vpop.xlane.xlu0 %52
    %v54 = vmax.f32 %v35, %v36
    %55 = vmax.xlane.f32.xlu0 %v54
    %v56 = vpop.xlane.xlu0 %55
    %v57 = vmax.f32 %v37, %v38
    %58 = vmax.xlane.f32.xlu0 %v57
    %v59 = vpop.xlane.xlu0 %58
    %v60 = vmax.f32 %v39, %v40
    %61 = vmax.xlane.f32.xlu0 %v60
    %v62 = vpop.xlane.xlu0 %61
    %v63 = vmax.f32 %v41, %v42
    %64 = vmax.xlane.f32.xlu0 %v63
    %v65 = vpop.xlane.xlu0 %64
    %v66 = vmax.f32 %v43, %v44
    %67 = vmax.xlane.f32.xlu0 %v66
    %v68 = vpop.xlane.xlu0 %67
    %v69 = vadd.f32 %v29, %v30
    %70 = vadd.xlane.f32.xlu0 %v69
    %v71 = vpop.xlane.xlu0 %70
    %v72 = vadd.f32 %v31, %v32
    %73 = vadd.xlane.f32.xlu0 %v72
    %v74 = vpop.xlane.xlu0 %73
    %v75 = vadd.f32 %v33, %v34
    %76 = vadd.xlane.f32.xlu0 %v75
    %v77 = vpop.xlane.xlu0 %76
    %v78 = vadd.f32 %v35, %v36
    %79 = vadd.xlane.f32.xlu0 %v78
    %v80 = vpop.xlane.xlu0 %79
    %v81 = vadd.f32 %v37, %v38
    %82 = vadd.xlane.f32.xlu0 %v81
    %v83 = vpop.xlane.xlu0 %82
    %v84 = vadd.f32 %v39, %v40
    %85 = vadd.xlane.f32.xlu0 %v84
    %v86 = vpop.xlane.xlu0 %85
    %v87 = vadd.f32 %v41, %v42
    %88 = vadd.xlane.f32.xlu0 %v87
    %v89 = vpop.xlane.xlu0 %88
    %v90 = vadd.f32 %v43, %v44
    %91 = vadd.xlane.f32.xlu0 %v90
    %v92 = vpop.xlane.xlu0 %91
    %v93 = vmul.f32 %v71, 0.00390625
    %v94 = vmul.f32 %v74, 0.00390625
    %v95 = vmul.f32 %v77, 0.00390625
    %v96 = vmul.f32 %v80, 0.00390625
    %v97 = vmul.f32 %v83, 0.00390625
    %v98 = vmul.f32 %v86, 0.00390625
    %v99 = vmul.f32 %v89, 0.00390625
    %v100 = vmul.f32 %v92, 0.00390625
    %v101 = vld [vmem:[%s1] sm:$0xff]
    %v102 = vld [vmem:[%s1 + $0x8] sm:$0xff]
    %v103 = vld [vmem:[%s1 + $0x10] sm:$0xff]
    %v104 = vld [vmem:[%s1 + $0x18] sm:$0xff]
    %v105 = vld [vmem:[%s2] sm:$0x3]
    %v114 = vlaneseq
    %v115 = vand.u32 %v114, 127
    %v116 = vlaneseq
    %v117 = vshrl.u32 %v116, 7
    %v118 = vsub.s32 %v115, %v117
    %v119 = vrot.slane %v47, %v118
    %v120 = vadd.s32 %v115, 4294967288
    %v121 = vlaneseq
    %v122 = vshrl.u32 %v121, 7
    %v123 = vsub.s32 %v120, %v122
    %v124 = vrot.slane %v50, %v123
    %vm125 = vcmask 130112
    %v126 = vsel %vm125, %v124, %v119
    %v127 = vadd.s32 %v115, 4294967280
    %v128 = vlaneseq
    %v129 = vshrl.u32 %v128, 7
    %v130 = vsub.s32 %v127, %v129
    %v131 = vrot.slane %v53, %v130
    %vm132 = vcmask 195712
    %v133 = vsel %vm132, %v131, %v126
    %v134 = vadd.s32 %v115, 4294967272
    %v135 = vlaneseq
    %v136 = vshrl.u32 %v135, 7
    %v137 = vsub.s32 %v134, %v136
    %v138 = vrot.slane %v56, %v137
    %vm139 = vcmask 261312
    %v140 = vsel %vm139, %v138, %v133
    %v141 = vlaneseq
    %v142 = vshrl.u32 %v141, 7
    %v143 = vsub.s32 %v115, %v142
    %v144 = vrot.slane %v59, %v143
    %v145 = vlaneseq
    %v146 = vshrl.u32 %v145, 7
    %v147 = vsub.s32 %v120, %v146
    %v148 = vrot.slane %v62, %v147
    %v149 = vsel %vm125, %v148, %v144
    %v150 = vlaneseq
    %v151 = vshrl.u32 %v150, 7
    %v152 = vsub.s32 %v127, %v151
    %v153 = vrot.slane %v65, %v152
    %v154 = vsel %vm132, %v153, %v149
    %v155 = vlaneseq
    %v156 = vshrl.u32 %v155, 7
    %v157 = vsub.s32 %v134, %v156
    %v158 = vrot.slane %v68, %v157
    %v159 = vsel %vm139, %v158, %v154
    %vm160 = vcmask 1041409
    %v161 = vsel %vm160, %v159, %v140
    %vm162 = vcmask 261120
    %v163 = vsel %vm162, %v161, 0
    %165 = vmatprep.subr.mxu0 0.0
    %166 = vmatpush1.msra.mxu0 %v101
    %167 = vmatprep.subr.mxu0 0.0
    %168 = vmatpush1.msra.mxu0 %v102
    %169 = vmatprep.subr.mxu0 0.0
    %170 = vmatpush1.msra.mxu0 %v103
    %171 = vmatprep.subr.mxu0 0.0
    %172 = vmatpush1.msra.mxu0 %v104
    %173 = vmatprep.subr.mxu0 0.0
    %174 = vmatpush1.msra.mxu0 0.0
    %175 = vmatprep.subr.mxu0 0.0
    %176 = vmatpush1.msra.mxu0 0.0
    %177 = vmatprep.subr.mxu0 0.0
    %178 = vmatpush1.msra.mxu0 0.0
    %179 = vmatprep.subr.mxu0 0.0
    %180 = vmatpush1.msra.mxu0 0.0
    %181 = vmatprep.subr.mxu0 0.0
    %182 = vmatpush1.msra.mxu0 0.0
    %183 = vmatprep.subr.mxu0 0.0
    %184 = vmatpush1.msra.mxu0 0.0
    %185 = vmatprep.subr.mxu0 0.0
    %186 = vmatpush1.msra.mxu0 0.0
    %187 = vmatprep.subr.mxu0 0.0
    %188 = vmatpush1.msra.mxu0 0.0
    %189 = vmatprep.subr.mxu0 0.0
    %190 = vmatpush1.msra.mxu0 0.0
    %191 = vmatprep.subr.mxu0 0.0
    %192 = vmatpush1.msra.mxu0 0.0
    %193 = vmatprep.subr.mxu0 0.0
    %194 = vmatpush1.msra.mxu0 0.0
    %195 = vmatprep.subr.mxu0 0.0
    %196 = vmatpush1.msra.mxu0 0.0
    %197 = vmatprep.subr.mxu0 0.0
    %198 = vmatpush1.msra.mxu0 0.0
    %199 = vmatprep.subr.mxu0 0.0
    %200 = vmatpush1.msra.mxu0 0.0
    %201 = vmatprep.subr.mxu0 0.0
    %202 = vmatpush1.msra.mxu0 0.0
    %203 = vmatprep.subr.mxu0 0.0
    %204 = vmatpush1.msra.mxu0 0.0
    %205 = vmatprep.subr.mxu0 0.0
    %206 = vmatpush1.msra.mxu0 0.0
    %207 = vmatprep.subr.mxu0 0.0
    %208 = vmatpush1.msra.mxu0 0.0
    %209 = vmatprep.subr.mxu0 0.0
    %210 = vmatpush1.msra.mxu0 0.0
    %211 = vmatprep.subr.mxu0 0.0
    %212 = vmatpush1.msra.mxu0 0.0
    %213 = vmatprep.subr.mxu0 0.0
    %214 = vmatpush1.msra.mxu0 0.0
    %215 = vmatprep.subr.mxu0 0.0
    %216 = vmatpush1.msra.mxu0 0.0
    %217 = vmatprep.subr.mxu0 0.0
    %218 = vmatpush1.msra.mxu0 0.0
    %219 = vmatprep.subr.mxu0 0.0
    %220 = vmatpush1.msra.mxu0 0.0
    %221 = vmatprep.subr.mxu0 0.0
    %222 = vmatpush1.msra.mxu0 0.0
    %223 = vmatprep.subr.mxu0 0.0
    %224 = vmatpush1.msra.mxu0 0.0
    %225 = vmatprep.subr.mxu0 0.0
    %226 = vmatpush1.msra.mxu0 0.0
    %227 = vmatprep.subr.mxu0 0.0
    %228 = vmatpush1.msra.mxu0 0.0
    %229 = vmatprep.mubr.f32.mxu0 0.0
    %230 = vmatmul.mubr.f32.gmra.mrb[0].mxu0 %v163
    %v231 = vpop.f32.mrb[0].mxu0
    %v232 = vadd.f32 0.0, %v231
    %v233 = vpop.f32.mrb[0].mxu0
    %234 = vdwg.mxu0
    %v235 = vmax.f32 %v232, 0.0
    %vm236 = vcmask 15360
    %v238 = vsel %vm236, %v235, 0
    %vm240 = vcmask 1041408
    %v242 = vsel %vm240, %v105, 0
    %244 = vmatprep.subr.mxu0 0.0
    %245 = vmatpush1.msra.mxu0 %v242
    %246 = vmatprep.subr.mxu0 0.0
    %247 = vmatpush1.msra.mxu0 0.0
    %248 = vmatprep.subr.mxu0 0.0
    %249 = vmatpush1.msra.mxu0 0.0
    %250 = vmatprep.subr.mxu0 0.0
    %251 = vmatpush1.msra.mxu0 0.0
    %252 = vmatprep.subr.mxu0 0.0
    %253 = vmatpush1.msra.mxu0 0.0
    %254 = vmatprep.subr.mxu0 0.0
    %255 = vmatpush1.msra.mxu0 0.0
    %256 = vmatprep.subr.mxu0 0.0
    %257 = vmatpush1.msra.mxu0 0.0
    %258 = vmatprep.subr.mxu0 0.0
    %259 = vmatpush1.msra.mxu0 0.0
    %260 = vmatprep.subr.mxu0 0.0
    %261 = vmatpush1.msra.mxu0 0.0
    %262 = vmatprep.subr.mxu0 0.0
    %263 = vmatpush1.msra.mxu0 0.0
    %264 = vmatprep.subr.mxu0 0.0
    %265 = vmatpush1.msra.mxu0 0.0
    %266 = vmatprep.subr.mxu0 0.0
    %267 = vmatpush1.msra.mxu0 0.0
    %268 = vmatprep.subr.mxu0 0.0
    %269 = vmatpush1.msra.mxu0 0.0
    %270 = vmatprep.subr.mxu0 0.0
    %271 = vmatpush1.msra.mxu0 0.0
    %272 = vmatprep.subr.mxu0 0.0
    %273 = vmatpush1.msra.mxu0 0.0
    %274 = vmatprep.subr.mxu0 0.0
    %275 = vmatpush1.msra.mxu0 0.0
    %276 = vmatprep.subr.mxu0 0.0
    %277 = vmatpush1.msra.mxu0 0.0
    %278 = vmatprep.subr.mxu0 0.0
    %279 = vmatpush1.msra.mxu0 0.0
    %280 = vmatprep.subr.mxu0 0.0
    %281 = vmatpush1.msra.mxu0 0.0
    %282 = vmatprep.subr.mxu0 0.0
    %283 = vmatpush1.msra.mxu0 0.0
    %284 = vmatprep.subr.mxu0 0.0
    %285 = vmatpush1.msra.mxu0 0.0
    %286 = vmatprep.subr.mxu0 0.0
    %287 = vmatpush1.msra.mxu0 0.0
    %288 = vmatprep.subr.mxu0 0.0
    %289 = vmatpush1.msra.mxu0 0.0
    %290 = vmatprep.subr.mxu0 0.0
    %291 = vmatpush1.msra.mxu0 0.0
    %292 = vmatprep.subr.mxu0 0.0
    %293 = vmatpush1.msra.mxu0 0.0
    %294 = vmatprep.subr.mxu0 0.0
    %295 = vmatpush1.msra.mxu0 0.0
    %296 = vmatprep.subr.mxu0 0.0
    %297 = vmatpush1.msra.mxu0 0.0
    %298 = vmatprep.subr.mxu0 0.0
    %299 = vmatpush1.msra.mxu0 0.0
    %300 = vmatprep.subr.mxu0 0.0
    %301 = vmatpush1.msra.mxu0 0.0
    %302 = vmatprep.subr.mxu0 0.0
    %303 = vmatpush1.msra.mxu0 0.0
    %304 = vmatprep.subr.mxu0 0.0
    %305 = vmatpush1.msra.mxu0 0.0
    %306 = vmatprep.subr.mxu0 0.0
    %307 = vmatpush1.msra.mxu0 0.0
    %308 = vmatprep.mubr.f32.mxu0 0.0
    %309 = vmatmul.mubr.f32.gmra.mrb[0].mxu0 %v238
    %v310 = vpop.f32.mrb[0].mxu0
    %v311 = vadd.f32 0.0, %v310
    %v312 = vpop.f32.mrb[0].mxu0
    %313 = vdwg.mxu0
    %v314 = vxor.u32 %v311, 2147483648
    %v315 = vmul.f32 %v314, 1.442695
    %v316 = vpow.pop %v315
    %v317 = vadd.f32 %v316, 1.0
    %v318 = vrcp.pop %v317
    %v319 = vmul.f32 1.0, %v318
    %v328 = vlaneseq
    %v329 = vshrl.u32 %v328, 7
    %v330 = vsub.s32 %v115, %v329
    %v331 = vrot.slane %v93, %v330
    %v332 = vlaneseq
    %v333 = vshrl.u32 %v332, 7
    %v334 = vsub.s32 %v120, %v333
    %v335 = vrot.slane %v94, %v334
    %v336 = vsel %vm125, %v335, %v331
    %v337 = vlaneseq
    %v338 = vshrl.u32 %v337, 7
    %v339 = vsub.s32 %v127, %v338
    %v340 = vrot.slane %v95, %v339
    %v341 = vsel %vm132, %v340, %v336
    %v342 = vlaneseq
    %v343 = vshrl.u32 %v342, 7
    %v344 = vsub.s32 %v134, %v343
    %v345 = vrot.slane %v96, %v344
    %v346 = vsel %vm139, %v345, %v341
    %v347 = vlaneseq
    %v348 = vshrl.u32 %v347, 7
    %v349 = vsub.s32 %v115, %v348
    %v350 = vrot.slane %v97, %v349
    %v351 = vlaneseq
    %v352 = vshrl.u32 %v351, 7
    %v353 = vsub.s32 %v120, %v352
    %v354 = vrot.slane %v98, %v353
    %v355 = vsel %vm125, %v354, %v350
    %v356 = vlaneseq
    %v357 = vshrl.u32 %v356, 7
    %v358 = vsub.s32 %v127, %v357
    %v359 = vrot.slane %v99, %v358
    %v360 = vsel %vm132, %v359, %v355
    %v361 = vlaneseq
    %v362 = vshrl.u32 %v361, 7
    %v363 = vsub.s32 %v134, %v362
    %v364 = vrot.slane %v100, %v363
    %v365 = vsel %vm139, %v364, %v360
    %v366 = vsel %vm160, %v365, %v346
    %v367 = vsel %vm162, %v366, 0
    %369 = vmatprep.subr.mxu0 0.0
    %370 = vmatpush1.msra.mxu0 %v101
    %371 = vmatprep.subr.mxu0 0.0
    %372 = vmatpush1.msra.mxu0 %v102
    %373 = vmatprep.subr.mxu0 0.0
    %374 = vmatpush1.msra.mxu0 %v103
    %375 = vmatprep.subr.mxu0 0.0
    %376 = vmatpush1.msra.mxu0 %v104
    %377 = vmatprep.subr.mxu0 0.0
    %378 = vmatpush1.msra.mxu0 0.0
    %379 = vmatprep.subr.mxu0 0.0
    %380 = vmatpush1.msra.mxu0 0.0
    %381 = vmatprep.subr.mxu0 0.0
    %382 = vmatpush1.msra.mxu0 0.0
    %383 = vmatprep.subr.mxu0 0.0
    %384 = vmatpush1.msra.mxu0 0.0
    %385 = vmatprep.subr.mxu0 0.0
    %386 = vmatpush1.msra.mxu0 0.0
    %387 = vmatprep.subr.mxu0 0.0
    %388 = vmatpush1.msra.mxu0 0.0
    %389 = vmatprep.subr.mxu0 0.0
    %390 = vmatpush1.msra.mxu0 0.0
    %391 = vmatprep.subr.mxu0 0.0
    %392 = vmatpush1.msra.mxu0 0.0
    %393 = vmatprep.subr.mxu0 0.0
    %394 = vmatpush1.msra.mxu0 0.0
    %395 = vmatprep.subr.mxu0 0.0
    %396 = vmatpush1.msra.mxu0 0.0
    %397 = vmatprep.subr.mxu0 0.0
    %398 = vmatpush1.msra.mxu0 0.0
    %399 = vmatprep.subr.mxu0 0.0
    %400 = vmatpush1.msra.mxu0 0.0
    %401 = vmatprep.subr.mxu0 0.0
    %402 = vmatpush1.msra.mxu0 0.0
    %403 = vmatprep.subr.mxu0 0.0
    %404 = vmatpush1.msra.mxu0 0.0
    %405 = vmatprep.subr.mxu0 0.0
    %406 = vmatpush1.msra.mxu0 0.0
    %407 = vmatprep.subr.mxu0 0.0
    %408 = vmatpush1.msra.mxu0 0.0
    %409 = vmatprep.subr.mxu0 0.0
    %410 = vmatpush1.msra.mxu0 0.0
    %411 = vmatprep.subr.mxu0 0.0
    %412 = vmatpush1.msra.mxu0 0.0
    %413 = vmatprep.subr.mxu0 0.0
    %414 = vmatpush1.msra.mxu0 0.0
    %415 = vmatprep.subr.mxu0 0.0
    %416 = vmatpush1.msra.mxu0 0.0
    %417 = vmatprep.subr.mxu0 0.0
    %418 = vmatpush1.msra.mxu0 0.0
    %419 = vmatprep.subr.mxu0 0.0
    %420 = vmatpush1.msra.mxu0 0.0
    %421 = vmatprep.subr.mxu0 0.0
    %422 = vmatpush1.msra.mxu0 0.0
    %423 = vmatprep.subr.mxu0 0.0
    %424 = vmatpush1.msra.mxu0 0.0
    %425 = vmatprep.subr.mxu0 0.0
    %426 = vmatpush1.msra.mxu0 0.0
    %427 = vmatprep.subr.mxu0 0.0
    %428 = vmatpush1.msra.mxu0 0.0
    %429 = vmatprep.subr.mxu0 0.0
    %430 = vmatpush1.msra.mxu0 0.0
    %431 = vmatprep.subr.mxu0 0.0
    %432 = vmatpush1.msra.mxu0 0.0
    %433 = vmatprep.mubr.f32.mxu0 0.0
    %434 = vmatmul.mubr.f32.gmra.mrb[0].mxu0 %v367
    %v435 = vpop.f32.mrb[0].mxu0
    %v436 = vadd.f32 0.0, %v435
    %v437 = vpop.f32.mrb[0].mxu0
    %438 = vdwg.mxu0
    %v439 = vmax.f32 %v436, 0.0
    %v441 = vsel %vm236, %v439, 0
    %443 = vmatprep.subr.mxu0 0.0
    %444 = vmatpush1.msra.mxu0 %v242
    %445 = vmatprep.subr.mxu0 0.0
    %446 = vmatpush1.msra.mxu0 0.0
    %447 = vmatprep.subr.mxu0 0.0
    %448 = vmatpush1.msra.mxu0 0.0
    %449 = vmatprep.subr.mxu0 0.0
    %450 = vmatpush1.msra.mxu0 0.0
    %451 = vmatprep.subr.mxu0 0.0
    %452 = vmatpush1.msra.mxu0 0.0
    %453 = vmatprep.subr.mxu0 0.0
    %454 = vmatpush1.msra.mxu0 0.0
    %455 = vmatprep.subr.mxu0 0.0
    %456 = vmatpush1.msra.mxu0 0.0
    %457 = vmatprep.subr.mxu0 0.0
    %458 = vmatpush1.msra.mxu0 0.0
    %459 = vmatprep.subr.mxu0 0.0
    %460 = vmatpush1.msra.mxu0 0.0
    %461 = vmatprep.subr.mxu0 0.0
    %462 = vmatpush1.msra.mxu0 0.0
    %463 = vmatprep.subr.mxu0 0.0
    %464 = vmatpush1.msra.mxu0 0.0
    %465 = vmatprep.subr.mxu0 0.0
    %466 = vmatpush1.msra.mxu0 0.0
    %467 = vmatprep.subr.mxu0 0.0
    %468 = vmatpush1.msra.mxu0 0.0
    %469 = vmatprep.subr.mxu0 0.0
    %470 = vmatpush1.msra.mxu0 0.0
    %471 = vmatprep.subr.mxu0 0.0
    %472 = vmatpush1.msra.mxu0 0.0
    %473 = vmatprep.subr.mxu0 0.0
    %474 = vmatpush1.msra.mxu0 0.0
    %475 = vmatprep.subr.mxu0 0.0
    %476 = vmatpush1.msra.mxu0 0.0
    %477 = vmatprep.subr.mxu0 0.0
    %478 = vmatpush1.msra.mxu0 0.0
    %479 = vmatprep.subr.mxu0 0.0
    %480 = vmatpush1.msra.mxu0 0.0
    %481 = vmatprep.subr.mxu0 0.0
    %482 = vmatpush1.msra.mxu0 0.0
    %483 = vmatprep.subr.mxu0 0.0
    %484 = vmatpush1.msra.mxu0 0.0
    %485 = vmatprep.subr.mxu0 0.0
    %486 = vmatpush1.msra.mxu0 0.0
    %487 = vmatprep.subr.mxu0 0.0
    %488 = vmatpush1.msra.mxu0 0.0
    %489 = vmatprep.subr.mxu0 0.0
    %490 = vmatpush1.msra.mxu0 0.0
    %491 = vmatprep.subr.mxu0 0.0
    %492 = vmatpush1.msra.mxu0 0.0
    %493 = vmatprep.subr.mxu0 0.0
    %494 = vmatpush1.msra.mxu0 0.0
    %495 = vmatprep.subr.mxu0 0.0
    %496 = vmatpush1.msra.mxu0 0.0
    %497 = vmatprep.subr.mxu0 0.0
    %498 = vmatpush1.msra.mxu0 0.0
    %499 = vmatprep.subr.mxu0 0.0
    %500 = vmatpush1.msra.mxu0 0.0
    %501 = vmatprep.subr.mxu0 0.0
    %502 = vmatpush1.msra.mxu0 0.0
    %503 = vmatprep.subr.mxu0 0.0
    %504 = vmatpush1.msra.mxu0 0.0
    %505 = vmatprep.subr.mxu0 0.0
    %506 = vmatpush1.msra.mxu0 0.0
    %507 = vmatprep.mubr.f32.mxu0 0.0
    %508 = vmatmul.mubr.f32.gmra.mrb[0].mxu0 %v441
    %v509 = vpop.f32.mrb[0].mxu0
    %v510 = vadd.f32 0.0, %v509
    %v511 = vpop.f32.mrb[0].mxu0
    %512 = vdwg.mxu0
    %v513 = vxor.u32 %v510, 2147483648
    %v514 = vmul.f32 %v513, 1.442695
    %v515 = vpow.pop %v514
    %v516 = vadd.f32 %v515, 1.0
    %v517 = vrcp.pop %v516
    %v518 = vmul.f32 1.0, %v517
    %v519 = vadd.f32 %v319, %v518
    %v520 = vxor.u32 %v519, 2147483648
    %v521 = vmul.f32 %v520, 1.442695
    %v522 = vpow.pop %v521
    %v523 = vadd.f32 %v522, 1.0
    %v524 = vrcp.pop %v523
    %v525 = vmul.f32 1.0, %v524
    %v526 = vlaneseq
    %v527 = vshrl.u32 %v526, 7
    %v528 = vsub.s32 0, %v527
    %v529 = vrot.slane %v525, %v528
    %531 = vbcast.lane.b32.xlu0 %v529, 256
    %v532 = vpop.permute.xlu0 %531
    %s534 = sor.u32 256, 8
    %535 = vbcast.lane.b32.xlu0 %v529, %s534
    %v536 = vpop.permute.xlu0 %535
    %s538 = sor.u32 256, 16
    %539 = vbcast.lane.b32.xlu0 %v529, %s538
    %v540 = vpop.permute.xlu0 %539
    %s542 = sor.u32 256, 24
    %543 = vbcast.lane.b32.xlu0 %v529, %s542
    %v544 = vpop.permute.xlu0 %543
    %v545 = vlaneseq
    %v546 = vshrl.u32 %v545, 7
    %v547 = vsub.s32 1, %v546
    %v548 = vrot.slane %v525, %v547
    %550 = vbcast.lane.b32.xlu0 %v548, 256
    %v551 = vpop.permute.xlu0 %550
    %s553 = sor.u32 256, 8
    %554 = vbcast.lane.b32.xlu0 %v548, %s553
    %v555 = vpop.permute.xlu0 %554
    %s557 = sor.u32 256, 16
    %558 = vbcast.lane.b32.xlu0 %v548, %s557
    %v559 = vpop.permute.xlu0 %558
    %s561 = sor.u32 256, 24
    %562 = vbcast.lane.b32.xlu0 %v548, %s561
    %v563 = vpop.permute.xlu0 %562
    %v564 = vmul.f32 %v29, %v532
    %v565 = vmul.f32 %v30, %v532
    %v566 = vmul.f32 %v31, %v536
    %v567 = vmul.f32 %v32, %v536
    %v568 = vmul.f32 %v33, %v540
    %v569 = vmul.f32 %v34, %v540
    %v570 = vmul.f32 %v35, %v544
    %v571 = vmul.f32 %v36, %v544
    %v572 = vmul.f32 %v37, %v551
    %v573 = vmul.f32 %v38, %v551
    %v574 = vmul.f32 %v39, %v555
    %v575 = vmul.f32 %v40, %v555
    %v576 = vmul.f32 %v41, %v559
    %v577 = vmul.f32 %v42, %v559
    %v578 = vmul.f32 %v43, %v563
    %v579 = vmul.f32 %v44, %v563
    %580 = vst [vmem:[#allocation5] sm:$0xff] %v564
    %581 = vst [vmem:[#allocation5 + $0x8] sm:$0xff] %v565
    %582 = vst [vmem:[#allocation5 + $0x10] sm:$0xff] %v566
    %583 = vst [vmem:[#allocation5 + $0x18] sm:$0xff] %v567
    %584 = vst [vmem:[#allocation5 + $0x20] sm:$0xff] %v568
    %585 = vst [vmem:[#allocation5 + $0x28] sm:$0xff] %v569
    %586 = vst [vmem:[#allocation5 + $0x30] sm:$0xff] %v570
    %587 = vst [vmem:[#allocation5 + $0x38] sm:$0xff] %v571
    %588 = vst [vmem:[#allocation5 + $0x40] sm:$0xff] %v572
    %589 = vst [vmem:[#allocation5 + $0x48] sm:$0xff] %v573
    %590 = vst [vmem:[#allocation5 + $0x50] sm:$0xff] %v574
    %591 = vst [vmem:[#allocation5 + $0x58] sm:$0xff] %v575
    %592 = vst [vmem:[#allocation5 + $0x60] sm:$0xff] %v576
    %593 = vst [vmem:[#allocation5 + $0x68] sm:$0xff] %v577
    %594 = vst [vmem:[#allocation5 + $0x70] sm:$0xff] %v578
    %595 = vst [vmem:[#allocation5 + $0x78] sm:$0xff] %v579
    // Predicated region
    $region18: #{tpu_custom_call.1} parent=1 // pred_check
      _
    $region19: #{tpu_custom_call.1} parent=1 // pred_check_branch
      %597 = sbr.rel (0) target = $region21
    $region20: #{tpu_custom_call.1} parent=1 // pred_region
      %s599 = ssub.s32 2048, 2048
      %600 = vsyncadd [#allocation4], %s599
      %s601 = sshll.u32 [#allocation5], 4
      %s602 = int_to_ptr.vmem [resolvable:$true] %s601
      %607 = dma.vmem_to_hbm [thread:$0]  %s602, 2048, %s3, [#allocation4], 256, 256, 16
    $region21: #{tpu_custom_call.1} parent=1 // pred_fallthru
      _
    // Predicated region
    $region22: #{tpu_custom_call.1} parent=1 // pred_check
      _
    $region23: #{tpu_custom_call.1} parent=1 // pred_check_branch
      %609 = sbr.rel (0) target = $region25
    $region24: #{tpu_custom_call.1} parent=1 // pred_region
      %610 = dma.done [#allocation4], 2048
    $region25: #{tpu_custom_call.1} parent=1 // pred_fallthru
      _
    %611 = vsyncpa [#allocation3], 1
    %612 = vsyncpa [#allocation4], 1

</llo_original>
